<compile_context>
chip_gen: v7x
topology: tpu7x:2x2x1
jax: 0.10.0
libtpu: 0.0.40
codegen_flags: <defaults>
</compile_context>

<pallas_src>
import functools

import jax
import jax.numpy as jnp
from jax.experimental import pallas as pl
from jax.experimental.pallas import tpu as pltpu


def layernorm_kernel(x_ref, scale_ref, shift_ref, o_ref, *, eps):
    x = x_ref[...].astype(jnp.float32)                      # (tile_rows, E)
    # Single pass: both moments from the same read of x.
    mean = jnp.mean(x, axis=-1, keepdims=True)              # (tile_rows, 1)
    mean_sq = jnp.mean(x * x, axis=-1, keepdims=True)       # (tile_rows, 1)
    var = jnp.maximum(mean_sq - mean * mean, 0.0)           # unbiased=False; clamp fp rounding
    inv_std = jax.lax.rsqrt(var + eps)                      # EUP rsqrt (free slot)
    # Fused normalize + affine: no separate full-tile `centered` temporary.
    out = (x - mean) * inv_std * scale_ref[...] + shift_ref[...]
    o_ref[...] = out.astype(o_ref.dtype)


def _vmem_capacity_bytes():
    """Physical VMEM per TensorCore; conservative fallback covers v7x (64 MiB)."""
    try:
        return int(pltpu.get_tpu_info().vmem_capacity_bytes)
    except Exception:
        return 64 * 1024 * 1024


def _pick_tile_rows(rows, emb_dim, itemsize, tile_budget_bytes):
    """Largest row tile fitting the VMEM budget, capped for roofline + grid depth."""
    # Per tile row: input + output tiles, each double-buffered (x2), in x's
    # dtype, plus ~3 full-tile f32 temporaries live in the kernel body
    # (x.astype(f32), the normalized product, the pre-downcast output).
    bytes_per_row = emb_dim * (4 * itemsize + 3 * 4)
    tile = tile_budget_bytes // max(bytes_per_row, 1)
    tile = min(tile, 512)                                   # HBM roofline flat past ~512 rows
    tile = min(tile, max(256, -(-rows // 8)))               # keep >= ~8 grid steps when rows allow
    tile = max(8, (tile // 8) * 8)                          # sublane multiple
    tile = min(tile, max(8, ((rows + 7) // 8) * 8))         # never wider than the (8-aligned) row count
    return int(tile)


def layer_norm(x, scale, shift, *, eps=1e-5, tile_rows=None):
    """x: (..., emb_dim); scale/shift: (emb_dim,). Matches the torch LayerNorm module."""
    orig_shape = x.shape
    emb_dim = orig_shape[-1]
    x2d = x.reshape(-1, emb_dim)
    rows = x2d.shape[0]
    itemsize = jnp.dtype(x.dtype).itemsize

    vmem_cap = _vmem_capacity_bytes()
    # Never request the full physical capacity (Mosaic scratch / semaphores /
    # temporaries need headroom; only tight on v7x's 64 MiB).
    vmem_request_cap = (vmem_cap * 3) // 4
    reserve = 4 * 1024 * 1024                               # params + compiler scratch
    tile_budget = max(vmem_request_cap - reserve, 4 * 1024 * 1024)

    if tile_rows is None:
        tile_rows = _pick_tile_rows(rows, emb_dim, itemsize, tile_budget)

    # No padding: the partial last block (if any) is read-padded and its
    # out-of-bounds stores are masked; rows are independent so garbage rows
    # never contaminate valid output.
    grid = (pl.cdiv(rows, tile_rows),)

    # Pre-cast params to the compute dtype once, outside the kernel.
    scale2d = scale.reshape(1, emb_dim).astype(jnp.float32)
    shift2d = shift.reshape(1, emb_dim).astype(jnp.float32)

    needed = tile_rows * emb_dim * (4 * itemsize + 3 * 4) + reserve
    # Explicit limit matters most on v5e (16 MiB scoped default vs 128 MiB physical).
    vmem_limit = int(min(vmem_request_cap, max(needed, 32 * 1024 * 1024)))

    def _call(row_semantics):
        return pl.pallas_call(
            functools.partial(layernorm_kernel, eps=eps),
            out_shape=jax.ShapeDtypeStruct((rows, emb_dim), x.dtype),
            grid_spec=pltpu.PrefetchScalarGridSpec(
                num_scalar_prefetch=0,
                grid=grid,
                in_specs=[
                    pl.BlockSpec((tile_rows, emb_dim), lambda i: (i, 0)),
                    pl.BlockSpec((1, emb_dim), lambda i: (0, 0)),
                    pl.BlockSpec((1, emb_dim), lambda i: (0, 0)),
                ],
                out_specs=pl.BlockSpec((tile_rows, emb_dim), lambda i: (i, 0)),
            ),
            compiler_params=pltpu.CompilerParams(
                dimension_semantics=(row_semantics,),
                vmem_limit_bytes=vmem_limit,
            ),
        )(x2d, scale2d, shift2d)

    try:
        # Real dual-TensorCore split of the row loop on v7x.
        out = _call(pltpu.CORE_PARALLEL)
    except Exception:
        # Single-TC chips / compilers that reject CORE_PARALLEL here.
        out = _call("parallel")

    return out.reshape(orig_shape)


def layer_norm_ref(x, scale, shift, eps=1e-5):
    mean = jnp.mean(x, axis=-1, keepdims=True)
    var = jnp.mean((x - mean) ** 2, axis=-1, keepdims=True)
    norm_x = (x - mean) / jnp.sqrt(var + eps)
    return scale * norm_x + shift


if __name__ == "__main__":
    batch, seq, emb_dim = 2, 8, 32

    key = jax.random.PRNGKey(0)
    x = jax.random.normal(key, (batch, seq, emb_dim), dtype=jnp.float32)

    # Deterministic parameter init matching the torch module's __init__:
    # scale = ones(emb_dim), shift = zeros(emb_dim)
    scale = jnp.ones((emb_dim,), dtype=jnp.float32)
    shift = jnp.zeros((emb_dim,), dtype=jnp.float32)

    out = layer_norm(x, scale, shift)
    out = jax.block_until_ready(out)

    ref = layer_norm_ref(x, scale, shift)
    assert out.shape == x.shape and out.dtype == x.dtype
    assert jnp.allclose(out, ref, atol=1e-5, rtol=1e-5), "mismatch vs reference"

    print("KERNEL_OK")
</pallas_src>

<mosaic_0001>
module attributes {stable_mosaic.version = 11 : i64} {
  func.func @layernorm_kernel(%arg0: i32, %arg1: memref<16x32xf32, #tpu.memory_space<vmem>>, %arg2: memref<1x32xf32, #tpu.memory_space<vmem>>, %arg3: memref<1x32xf32, #tpu.memory_space<vmem>>, %arg4: memref<16x32xf32, #tpu.memory_space<vmem>>) attributes {dimension_semantics = [#tpu.dimension_semantics<core_parallel>], iteration_bounds = array<i64: 1>, scalar_prefetch = 0 : i64, scratch_operands = 0 : i64, tpu.core_type = #tpu.core_type<tc>, window_params = [{transform_indices = @transform_0, window_bounds = array<i64: 16, 32>}, {pipeline_mode = #tpu.pipeline_mode<synchronous>, transform_indices = @transform_1, window_bounds = array<i64: 1, 32>}, {pipeline_mode = #tpu.pipeline_mode<synchronous>, transform_indices = @transform_2, window_bounds = array<i64: 1, 32>}, {transform_indices = @transform_3, window_bounds = array<i64: 16, 32>}]} {
    %c0 = arith.constant 0 : index
    %c0_0 = arith.constant 0 : index
    %0 = vector.load %arg1[%c0, %c0_0] : memref<16x32xf32, #tpu.memory_space<vmem>>, vector<16x32xf32>
    %cst = arith.constant dense<0.000000e+00> : vector<16xf32>
    %1 = vector.multi_reduction <add>, %0, %cst [1] : vector<16x32xf32> to vector<16xf32>
    %2 = vector.shape_cast %1 : vector<16xf32> to vector<16x1xf32>
    %cst_1 = arith.constant 3.200000e+01 : f32
    %3 = vector.broadcast %cst_1 : f32 to vector<16x1xf32>
    %4 = arith.divf %2, %3 : vector<16x1xf32>
    %5 = arith.mulf %0, %0 : vector<16x32xf32>
    %cst_2 = arith.constant dense<0.000000e+00> : vector<16xf32>
    %6 = vector.multi_reduction <add>, %5, %cst_2 [1] : vector<16x32xf32> to vector<16xf32>
    %7 = vector.shape_cast %6 : vector<16xf32> to vector<16x1xf32>
    %cst_3 = arith.constant 3.200000e+01 : f32
    %8 = vector.broadcast %cst_3 : f32 to vector<16x1xf32>
    %9 = arith.divf %7, %8 : vector<16x1xf32>
    %10 = arith.mulf %4, %4 : vector<16x1xf32>
    %11 = arith.subf %9, %10 : vector<16x1xf32>
    %cst_4 = arith.constant 0.000000e+00 : f32
    %12 = vector.broadcast %cst_4 : f32 to vector<16x1xf32>
    %13 = arith.maximumf %11, %12 : vector<16x1xf32>
    %cst_5 = arith.constant 9.99999974E-6 : f32
    %14 = vector.broadcast %cst_5 : f32 to vector<16x1xf32>
    %15 = arith.addf %13, %14 : vector<16x1xf32>
    %16 = math.rsqrt %15 : vector<16x1xf32>
    %17 = vector.broadcast %4 : vector<16x1xf32> to vector<16x32xf32>
    %18 = arith.subf %0, %17 : vector<16x32xf32>
    %19 = vector.broadcast %16 : vector<16x1xf32> to vector<16x32xf32>
    %20 = arith.mulf %18, %19 : vector<16x32xf32>
    %c0_6 = arith.constant 0 : index
    %c0_7 = arith.constant 0 : index
    %21 = vector.load %arg2[%c0_6, %c0_7] : memref<1x32xf32, #tpu.memory_space<vmem>>, vector<1x32xf32>
    %22 = vector.broadcast %21 : vector<1x32xf32> to vector<16x32xf32>
    %23 = arith.mulf %20, %22 : vector<16x32xf32>
    %c0_8 = arith.constant 0 : index
    %c0_9 = arith.constant 0 : index
    %24 = vector.load %arg3[%c0_8, %c0_9] : memref<1x32xf32, #tpu.memory_space<vmem>>, vector<1x32xf32>
    %25 = vector.broadcast %24 : vector<1x32xf32> to vector<16x32xf32>
    %26 = arith.addf %23, %25 : vector<16x32xf32>
    %c0_10 = arith.constant 0 : index
    %c0_11 = arith.constant 0 : index
    %27 = vector.load %arg4[%c0_10, %c0_11] : memref<16x32xf32, #tpu.memory_space<vmem>>, vector<16x32xf32>
    tpu.vector_store %arg4[%c0_10, %c0_11], %26 {strides = array<i32>} : memref<16x32xf32, #tpu.memory_space<vmem>>, vector<16x32xf32>,
    return
  }
  func.func @transform_0(%arg0: i32) -> (i32, i32) {
    %c0_i32 = arith.constant 0 : i32
    %c0_i32_0 = arith.constant 0 : i32
    return %arg0, %c0_i32 : i32, i32
  }
  func.func @transform_1(%arg0: i32) -> (i32, i32) {
    %c0_i32 = arith.constant 0 : i32
    %c0_i32_0 = arith.constant 0 : i32
    %c0_i32_1 = arith.constant 0 : i32
    return %c0_i32, %c0_i32_0 : i32, i32
  }
  func.func @transform_2(%arg0: i32) -> (i32, i32) {
    %c0_i32 = arith.constant 0 : i32
    %c0_i32_0 = arith.constant 0 : i32
    %c0_i32_1 = arith.constant 0 : i32
    return %c0_i32, %c0_i32_0 : i32, i32
  }
  func.func @transform_3(%arg0: i32) -> (i32, i32) {
    %c0_i32 = arith.constant 0 : i32
    %c0_i32_0 = arith.constant 0 : i32
    return %arg0, %c0_i32 : i32, i32
  }
}

module attributes {stable_mosaic.version = 11 : i64} {
  func.func @layernorm_kernel(%arg0: i32, %arg1: memref<16x32xf32, #tpu.memory_space<vmem>>, %arg2: memref<1x32xf32, #tpu.memory_space<vmem>>, %arg3: memref<1x32xf32, #tpu.memory_space<vmem>>, %arg4: memref<16x32xf32, #tpu.memory_space<vmem>>) attributes {dimension_semantics = [#tpu.dimension_semantics<parallel>], iteration_bounds = array<i64: 1>, scalar_prefetch = 0 : i64, scratch_operands = 0 : i64, tpu.core_type = #tpu.core_type<tc>, window_params = [{transform_indices = @transform_0, window_bounds = array<i64: 16, 32>}, {pipeline_mode = #tpu.pipeline_mode<synchronous>, transform_indices = @transform_1, window_bounds = array<i64: 1, 32>}, {pipeline_mode = #tpu.pipeline_mode<synchronous>, transform_indices = @transform_2, window_bounds = array<i64: 1, 32>}, {transform_indices = @transform_3, window_bounds = array<i64: 16, 32>}]} {
    %c0 = arith.constant 0 : index
    %c0_0 = arith.constant 0 : index
    %0 = vector.load %arg1[%c0, %c0_0] : memref<16x32xf32, #tpu.memory_space<vmem>>, vector<16x32xf32>
    %cst = arith.constant dense<0.000000e+00> : vector<16xf32>
    %1 = vector.multi_reduction <add>, %0, %cst [1] : vector<16x32xf32> to vector<16xf32>
    %2 = vector.shape_cast %1 : vector<16xf32> to vector<16x1xf32>
    %cst_1 = arith.constant 3.200000e+01 : f32
    %3 = vector.broadcast %cst_1 : f32 to vector<16x1xf32>
    %4 = arith.divf %2, %3 : vector<16x1xf32>
    %5 = arith.mulf %0, %0 : vector<16x32xf32>
    %cst_2 = arith.constant dense<0.000000e+00> : vector<16xf32>
    %6 = vector.multi_reduction <add>, %5, %cst_2 [1] : vector<16x32xf32> to vector<16xf32>
    %7 = vector.shape_cast %6 : vector<16xf32> to vector<16x1xf32>
    %cst_3 = arith.constant 3.200000e+01 : f32
    %8 = vector.broadcast %cst_3 : f32 to vector<16x1xf32>
    %9 = arith.divf %7, %8 : vector<16x1xf32>
    %10 = arith.mulf %4, %4 : vector<16x1xf32>
    %11 = arith.subf %9, %10 : vector<16x1xf32>
    %cst_4 = arith.constant 0.000000e+00 : f32
    %12 = vector.broadcast %cst_4 : f32 to vector<16x1xf32>
    %13 = arith.maximumf %11, %12 : vector<16x1xf32>
    %cst_5 = arith.constant 9.99999974E-6 : f32
    %14 = vector.broadcast %cst_5 : f32 to vector<16x1xf32>
    %15 = arith.addf %13, %14 : vector<16x1xf32>
    %16 = math.rsqrt %15 : vector<16x1xf32>
    %17 = vector.broadcast %4 : vector<16x1xf32> to vector<16x32xf32>
    %18 = arith.subf %0, %17 : vector<16x32xf32>
    %19 = vector.broadcast %16 : vector<16x1xf32> to vector<16x32xf32>
    %20 = arith.mulf %18, %19 : vector<16x32xf32>
    %c0_6 = arith.constant 0 : index
    %c0_7 = arith.constant 0 : index
    %21 = vector.load %arg2[%c0_6, %c0_7] : memref<1x32xf32, #tpu.memory_space<vmem>>, vector<1x32xf32>
    %22 = vector.broadcast %21 : vector<1x32xf32> to vector<16x32xf32>
    %23 = arith.mulf %20, %22 : vector<16x32xf32>
    %c0_8 = arith.constant 0 : index
    %c0_9 = arith.constant 0 : index
    %24 = vector.load %arg3[%c0_8, %c0_9] : memref<1x32xf32, #tpu.memory_space<vmem>>, vector<1x32xf32>
    %25 = vector.broadcast %24 : vector<1x32xf32> to vector<16x32xf32>
    %26 = arith.addf %23, %25 : vector<16x32xf32>
    %c0_10 = arith.constant 0 : index
    %c0_11 = arith.constant 0 : index
    %27 = vector.load %arg4[%c0_10, %c0_11] : memref<16x32xf32, #tpu.memory_space<vmem>>, vector<16x32xf32>
    tpu.vector_store %arg4[%c0_10, %c0_11], %26 {strides = array<i32>} : memref<16x32xf32, #tpu.memory_space<vmem>>, vector<16x32xf32>,
    return
  }
  func.func @transform_0(%arg0: i32) -> (i32, i32) {
    %c0_i32 = arith.constant 0 : i32
    %c0_i32_0 = arith.constant 0 : i32
    return %arg0, %c0_i32 : i32, i32
  }
  func.func @transform_1(%arg0: i32) -> (i32, i32) {
    %c0_i32 = arith.constant 0 : i32
    %c0_i32_0 = arith.constant 0 : i32
    %c0_i32_1 = arith.constant 0 : i32
    return %c0_i32, %c0_i32_0 : i32, i32
  }
  func.func @transform_2(%arg0: i32) -> (i32, i32) {
    %c0_i32 = arith.constant 0 : i32
    %c0_i32_0 = arith.constant 0 : i32
    %c0_i32_1 = arith.constant 0 : i32
    return %c0_i32, %c0_i32_0 : i32, i32
  }
  func.func @transform_3(%arg0: i32) -> (i32, i32) {
    %c0_i32 = arith.constant 0 : i32
    %c0_i32_0 = arith.constant 0 : i32
    return %arg0, %c0_i32 : i32, i32
  }
}

</mosaic_0001>

<llo_original>
// kernel: tpu_custom_call.1
$region0: #{tpu_custom_call.1}
  #allocation0 [shape = 'u32[]', space=smem, size = 0x4, offset = 0x4, fixed_abs, tag = 'smem constant byte address 0x4 - core index']
  #allocation1 [shape = 'u32[144,128]{1,0:T(1,128)}', space=vmem, size = 0x12000, scoped, tag = 'internal scratch']
  %s0 = inlined_call_operand.hbm [shape: f32[16,32], index: 0, kind: input, shape index: {}]
  %s1 = inlined_call_operand.vmem [shape: f32[1,32], index: 1, kind: input, shape index: {}]
  %s2 = inlined_call_operand.vmem [shape: f32[1,32], index: 2, kind: input, shape index: {}]
  %s3 = inlined_call_operand.hbm [shape: f32[16,32], index: 3, kind: output, shape index: {}]
  %s4 = sld [smem:[#allocation0]]
  $region26: #{tpu_custom_call.1} parent=0
    _
  %s6 = ssub.s32 1, %s4
  %s7 = scalar_select 0, %s6, %s4
  $region1: #{tpu_custom_call.1} parent=0
    #allocation2 [shape = 'u8[8192]{0}', space=vmem, size = 0x2000, scoped, tag = 'input window, operand 0, single buffered']
    #allocation3 [shape = 's32[1]{0}', space=sflag, size = 0x4, scoped, tag = 'scoped memory for tpu_custom_call.1']
    #allocation4 [shape = 's32[1]{0}', space=sflag, size = 0x4, scoped, tag = 'scoped memory for tpu_custom_call.1']
    #allocation5 [shape = 'u8[8192]{0}', space=vmem, size = 0x2000, scoped, tag = 'output window, operand 0, single buffered']
    %8 = vsyncpa [#allocation3], 0
    %9 = vsyncpa [#allocation4], 0
    // Predicated region
    $region2: #{tpu_custom_call.1} parent=1 // pred_check
      _
    $region3: #{tpu_custom_call.1} parent=1 // pred_check_branch
      %11 = sbr.rel (0) target = $region5
    $region4: #{tpu_custom_call.1} parent=1 // pred_region
      %s12 = smul.u32 2, %s7
      %s14 = ssub.s32 256, 256
      %15 = vsyncadd [#allocation3], %s14
      %s16 = smul.addr %s12, 128
      %s17 = scalar_lea.hbm %s0, %s16
      %s18 = sshll.u32 [#allocation2], 4
      %s19 = int_to_ptr.vmem [resolvable:$true] %s18
      %24 = dma.hbm_to_vmem [thread:$0]  %s17, 256, %s19, [#allocation3], 128, 128, 8
    $region5: #{tpu_custom_call.1} parent=1 // pred_fallthru
      _
    // Predicated region
    $region6: #{tpu_custom_call.1} parent=1 // pred_check
      _
    $region7: #{tpu_custom_call.1} parent=1 // pred_check_branch
      %26 = sbr.rel (0) target = $region9
    $region8: #{tpu_custom_call.1} parent=1 // pred_region
      _
    $region9: #{tpu_custom_call.1} parent=1 // pred_fallthru
      _
    // Predicated region
    $region10: #{tpu_custom_call.1} parent=1 // pred_check
      _
    $region11: #{tpu_custom_call.1} parent=1 // pred_check_branch
      %28 = sbr.rel (0) target = $region13
    $region12: #{tpu_custom_call.1} parent=1 // pred_region
      _
    $region13: #{tpu_custom_call.1} parent=1 // pred_fallthru
      _
    // Predicated region
    $region14: #{tpu_custom_call.1} parent=1 // pred_check
      _
    $region15: #{tpu_custom_call.1} parent=1 // pred_check_branch
      %30 = sbr.rel (0) target = $region17
    $region16: #{tpu_custom_call.1} parent=1 // pred_region
      %31 = dma.done [#allocation3], 256
    $region17: #{tpu_custom_call.1} parent=1 // pred_fallthru
      _
    %s32 = smul.u32 2, %s7
    %s33 = smul.u32 2, %s7
    %v34 = vld [vmem:[#allocation2] sm:$0xff]
    %v35 = vld [vmem:[#allocation2 + $0x8] sm:$0xff]
    %vm36 = vcmask 261120
    %v37 = vsel %vm36, %v34, 0.0
    %38 = vadd.xlane.f32.xlu0 %v37
    %v39 = vpop.xlane.xlu0 %38
    %v40 = vsel %vm36, %v35, 0.0
    %41 = vadd.xlane.f32.xlu0 %v40
    %v42 = vpop.xlane.xlu0 %41
    %v43 = vrcp.pop 32.0
    %v44 = vmul.f32 %v39, %v43
    %v45 = vmul.f32 %v42, %v43
    %v46 = vmul.f32 %v34, %v34
    %v47 = vmul.f32 %v35, %v35
    %v48 = vsel %vm36, %v46, 0.0
    %49 = vadd.xlane.f32.xlu0 %v48
    %v50 = vpop.xlane.xlu0 %49
    %v51 = vsel %vm36, %v47, 0.0
    %52 = vadd.xlane.f32.xlu0 %v51
    %v53 = vpop.xlane.xlu0 %52
    %v54 = vmul.f32 %v50, %v43
    %v55 = vmul.f32 %v53, %v43
    %v56 = vmul.f32 %v44, %v44
    %v57 = vmul.f32 %v45, %v45
    %v58 = vsub.f32 %v54, %v56
    %v59 = vsub.f32 %v55, %v57
    %v60 = vmax.f32 %v58, 0.0
    %v61 = vmax.f32 %v59, 0.0
    %v62 = vadd.f32 %v60, 1e-05
    %v63 = vadd.f32 %v61, 1e-05
    %v64 = vrsqrt.pop %v62
    %v65 = vrsqrt.pop %v63
    %v66 = vsub.f32 %v34, %v44
    %v67 = vsub.f32 %v35, %v45
    %v68 = vmul.f32 %v66, %v64
    %v69 = vmul.f32 %v67, %v65
    %v70 = vld [vmem:[%s1] sm:$0x1]
    %v72 = vlaneseq
    %v73 = vshrl.u32 %v72, 7
    %v74 = vsub.s32 0, %v73
    %v75 = vrot.slane %v70, %v74
    %v77 = vmul.f32 %v68, %v75
    %v78 = vmul.f32 %v69, %v75
    %v79 = vld [vmem:[%s2] sm:$0x1]
    %v81 = vlaneseq
    %v82 = vshrl.u32 %v81, 7
    %v83 = vsub.s32 0, %v82
    %v84 = vrot.slane %v79, %v83
    %v86 = vadd.f32 %v77, %v84
    %v87 = vadd.f32 %v78, %v84
    %88 = vst.msk [vmem:[#allocation5] sm:$0xff] %vm36, %v86
    %89 = vst.msk [vmem:[#allocation5 + $0x8] sm:$0xff] %vm36, %v87
    // Predicated region
    $region18: #{tpu_custom_call.1} parent=1 // pred_check
      _
    $region19: #{tpu_custom_call.1} parent=1 // pred_check_branch
      %91 = sbr.rel (0) target = $region21
    $region20: #{tpu_custom_call.1} parent=1 // pred_region
      %s92 = smul.u32 2, %s7
      %s94 = ssub.s32 256, 256
      %95 = vsyncadd [#allocation4], %s94
      %s96 = smul.addr %s92, 128
      %s97 = scalar_lea.hbm %s3, %s96
      %s98 = sshll.u32 [#allocation5], 4
      %s99 = int_to_ptr.vmem [resolvable:$true] %s98
      %104 = dma.vmem_to_hbm [thread:$0]  %s99, 256, %s97, [#allocation4], 128, 128, 8
    $region21: #{tpu_custom_call.1} parent=1 // pred_fallthru
      _
    // Predicated region
    $region22: #{tpu_custom_call.1} parent=1 // pred_check
      _
    $region23: #{tpu_custom_call.1} parent=1 // pred_check_branch
      %106 = sbr.rel (0) target = $region25
    $region24: #{tpu_custom_call.1} parent=1 // pred_region
      %107 = dma.done [#allocation4], 256
    $region25: #{tpu_custom_call.1} parent=1 // pred_fallthru
      _
    %108 = vsyncpa [#allocation3], 1
    %109 = vsyncpa [#allocation4], 1

// kernel: tpu_custom_call.1
$region0: #{tpu_custom_call.1}
  #allocation0 [shape = 'u32[]', space=smem, size = 0x4, offset = 0x4, fixed_abs, tag = 'smem constant byte address 0x4 - core index']
  #allocation1 [shape = 'u32[144,128]{1,0:T(1,128)}', space=vmem, size = 0x12000, scoped, tag = 'internal scratch']
  %s0 = inlined_call_operand.hbm [shape: f32[16,32], index: 0, kind: input, shape index: {}]
  %s1 = inlined_call_operand.vmem [shape: f32[1,32], index: 1, kind: input, shape index: {}]
  %s2 = inlined_call_operand.vmem [shape: f32[1,32], index: 2, kind: input, shape index: {}]
  %s3 = inlined_call_operand.hbm [shape: f32[16,32], index: 3, kind: output, shape index: {}]
  %s4 = sld [smem:[#allocation0]]
  $region26: #{tpu_custom_call.1} parent=0
    _
  %s6 = ssub.s32 1, %s4
  %s7 = scalar_select 0, %s6, %s4
  $region1: #{tpu_custom_call.1} parent=0
    #allocation2 [shape = 'u8[8192]{0}', space=vmem, size = 0x2000, scoped, tag = 'input window, operand 0, single buffered']
    #allocation3 [shape = 's32[1]{0}', space=sflag, size = 0x4, scoped, tag = 'scoped memory for tpu_custom_call.1']
    #allocation4 [shape = 's32[1]{0}', space=sflag, size = 0x4, scoped, tag = 'scoped memory for tpu_custom_call.1']
    #allocation5 [shape = 'u8[8192]{0}', space=vmem, size = 0x2000, scoped, tag = 'output window, operand 0, single buffered']
    %8 = vsyncpa [#allocation3], 0
    %9 = vsyncpa [#allocation4], 0
    // Predicated region
    $region2: #{tpu_custom_call.1} parent=1 // pred_check
      _
    $region3: #{tpu_custom_call.1} parent=1 // pred_check_branch
      %11 = sbr.rel (0) target = $region5
    $region4: #{tpu_custom_call.1} parent=1 // pred_region
      %s13 = ssub.s32 256, 256
      %14 = vsyncadd [#allocation3], %s13
      %s15 = sshll.u32 [#allocation2], 4
      %s16 = int_to_ptr.vmem [resolvable:$true] %s15
      %21 = dma.hbm_to_vmem [thread:$0]  %s0, 256, %s16, [#allocation3], 128, 128, 8
    $region5: #{tpu_custom_call.1} parent=1 // pred_fallthru
      _
    // Predicated region
    $region6: #{tpu_custom_call.1} parent=1 // pred_check
      _
    $region7: #{tpu_custom_call.1} parent=1 // pred_check_branch
      %23 = sbr.rel (0) target = $region9
    $region8: #{tpu_custom_call.1} parent=1 // pred_region
      _
    $region9: #{tpu_custom_call.1} parent=1 // pred_fallthru
      _
    // Predicated region
    $region10: #{tpu_custom_call.1} parent=1 // pred_check
      _
    $region11: #{tpu_custom_call.1} parent=1 // pred_check_branch
      %25 = sbr.rel (0) target = $region13
    $region12: #{tpu_custom_call.1} parent=1 // pred_region
      _
    $region13: #{tpu_custom_call.1} parent=1 // pred_fallthru
      _
    // Predicated region
    $region14: #{tpu_custom_call.1} parent=1 // pred_check
      _
    $region15: #{tpu_custom_call.1} parent=1 // pred_check_branch
      %27 = sbr.rel (0) target = $region17
    $region16: #{tpu_custom_call.1} parent=1 // pred_region
      %28 = dma.done [#allocation3], 256
    $region17: #{tpu_custom_call.1} parent=1 // pred_fallthru
      _
    %v29 = vld [vmem:[#allocation2] sm:$0xff]
    %v30 = vld [vmem:[#allocation2 + $0x8] sm:$0xff]
    %vm31 = vcmask 261120
    %v32 = vsel %vm31, %v29, 0.0
    %33 = vadd.xlane.f32.xlu0 %v32
    %v34 = vpop.xlane.xlu0 %33
    %v35 = vsel %vm31, %v30, 0.0
    %36 = vadd.xlane.f32.xlu0 %v35
    %v37 = vpop.xlane.xlu0 %36
    %v38 = vrcp.pop 32.0
    %v39 = vmul.f32 %v34, %v38
    %v40 = vmul.f32 %v37, %v38
    %v41 = vmul.f32 %v29, %v29
    %v42 = vmul.f32 %v30, %v30
    %v43 = vsel %vm31, %v41, 0.0
    %44 = vadd.xlane.f32.xlu0 %v43
    %v45 = vpop.xlane.xlu0 %44
    %v46 = vsel %vm31, %v42, 0.0
    %47 = vadd.xlane.f32.xlu0 %v46
    %v48 = vpop.xlane.xlu0 %47
    %v49 = vmul.f32 %v45, %v38
    %v50 = vmul.f32 %v48, %v38
    %v51 = vmul.f32 %v39, %v39
    %v52 = vmul.f32 %v40, %v40
    %v53 = vsub.f32 %v49, %v51
    %v54 = vsub.f32 %v50, %v52
    %v55 = vmax.f32 %v53, 0.0
    %v56 = vmax.f32 %v54, 0.0
    %v57 = vadd.f32 %v55, 1e-05
    %v58 = vadd.f32 %v56, 1e-05
    %v59 = vrsqrt.pop %v57
    %v60 = vrsqrt.pop %v58
    %v61 = vsub.f32 %v29, %v39
    %v62 = vsub.f32 %v30, %v40
    %v63 = vmul.f32 %v61, %v59
    %v64 = vmul.f32 %v62, %v60
    %v65 = vld [vmem:[%s1] sm:$0x1]
    %v67 = vlaneseq
    %v68 = vshrl.u32 %v67, 7
    %v69 = vsub.s32 0, %v68
    %v70 = vrot.slane %v65, %v69
    %v72 = vmul.f32 %v63, %v70
    %v73 = vmul.f32 %v64, %v70
    %v74 = vld [vmem:[%s2] sm:$0x1]
    %v76 = vlaneseq
    %v77 = vshrl.u32 %v76, 7
    %v78 = vsub.s32 0, %v77
    %v79 = vrot.slane %v74, %v78
    %v81 = vadd.f32 %v72, %v79
    %v82 = vadd.f32 %v73, %v79
    %83 = vst.msk [vmem:[#allocation5] sm:$0xff] %vm31, %v81
    %84 = vst.msk [vmem:[#allocation5 + $0x8] sm:$0xff] %vm31, %v82
    // Predicated region
    $region18: #{tpu_custom_call.1} parent=1 // pred_check
      _
    $region19: #{tpu_custom_call.1} parent=1 // pred_check_branch
      %86 = sbr.rel (0) target = $region21
    $region20: #{tpu_custom_call.1} parent=1 // pred_region
      %s88 = ssub.s32 256, 256
      %89 = vsyncadd [#allocation4], %s88
      %s90 = sshll.u32 [#allocation5], 4
      %s91 = int_to_ptr.vmem [resolvable:$true] %s90
      %96 = dma.vmem_to_hbm [thread:$0]  %s91, 256, %s3, [#allocation4], 128, 128, 8
    $region21: #{tpu_custom_call.1} parent=1 // pred_fallthru
      _
    // Predicated region
    $region22: #{tpu_custom_call.1} parent=1 // pred_check
      _
    $region23: #{tpu_custom_call.1} parent=1 // pred_check_branch
      %98 = sbr.rel (0) target = $region25
    $region24: #{tpu_custom_call.1} parent=1 // pred_region
      %99 = dma.done [#allocation4], 256
    $region25: #{tpu_custom_call.1} parent=1 // pred_fallthru
      _
    %100 = vsyncpa [#allocation3], 1
    %101 = vsyncpa [#allocation4], 1

</llo_original>
